<compile_context>
chip_gen: v6e
topology: v6e:2x2x1
jax: 0.10.0
libtpu: 0.0.40
codegen_flags: <defaults>
</compile_context>

<pallas_src>
import functools

import jax
import jax.numpy as jnp
from jax.experimental import pallas as pl
from jax.experimental.pallas import tpu as pltpu


def _jaccard_kernel(logits_ref, target_ref, inter_ref, total_ref,
                    *, ignore_index, hw, tile_hw, needs_hw_mask):
    hw_id = pl.program_id(1)

    # Per-image accumulators live in the resident output blocks; zero them at
    # the start of each image's pixel loop.
    @pl.when(hw_id == 0)
    def _():
        inter_ref[...] = jnp.zeros_like(inter_ref)
        total_ref[...] = jnp.zeros_like(total_ref)

    x = logits_ref[0].astype(jnp.float32)          # (C, TP): classes x pixels
    tgt = target_ref[0].astype(jnp.int32)          # (1, TP)

    valid = tgt != ignore_index                    # (1, TP) bool
    if needs_hw_mask:
        # The last pixel tile of an image may run past H*W; mask those lanes
        # out and sanitize the (unspecified) padded logits before exp().
        lane = jax.lax.broadcasted_iota(jnp.int32, tgt.shape, 1)
        in_bounds = (hw_id * tile_hw + lane) < hw
        valid = valid & in_bounds
        x = jnp.where(in_bounds, x, 0.0)

    # Softmax over the class (sublane) axis.
    m = jnp.max(x, axis=0, keepdims=True)          # (1, TP)
    e = jnp.exp(x - m)                             # (C, TP)
    denom = jnp.sum(e, axis=0, keepdims=True)      # (1, TP)

    # Fold the valid mask into the per-column reciprocal and target once,
    # instead of masking the (C, TP)-wide arrays: saves ~3C VALU ops/pixel.
    validf = valid.astype(jnp.float32)             # (1, TP)
    inv_v = pl.reciprocal(denom) * validf          # (1, TP): 0 on ignored px
    tgt_m = jnp.where(valid, tgt, -1)              # (1, TP): -1 matches no class

    p_v = e * inv_v                                # (C, TP): softmax * valid
    class_ids = jax.lax.broadcasted_iota(jnp.int32, x.shape, 0)
    onehot_v = (tgt_m == class_ids).astype(jnp.float32)   # (C, TP): onehot*valid

    # Per-class masked reductions over the pixel (lane) axis.
    inter_ref[...] += jnp.sum(p_v * onehot_v, axis=1, keepdims=True)[None]
    total_ref[...] += (jnp.sum(p_v, axis=1, keepdims=True)
                       + jnp.sum(onehot_v, axis=1, keepdims=True))[None]


def jaccard_loss(logits, target, *, ignore_index=255, smooth=1.0, max_tile=None):
    """logits: (N, C, H, W) float (f32 or bf16); target: (N, H, W) int
    (uint8 / int32 / ... — must represent ignore_index exactly, so not int8).
    Returns the scalar f32 Jaccard loss matching the PyTorch module's forward."""
    N, C, H, W = logits.shape
    HW = H * W

    # Free reshapes (bitcasts): no transpose, no dtype change in HBM.
    x = logits.reshape(N, C, HW)
    t = target.reshape(N, 1, HW)

    def _rup(a, b):
        return pl.cdiv(a, b) * b

    def _rdown(a, b):
        return (a // b) * b

    logits_isz = jnp.dtype(logits.dtype).itemsize
    tgt_isz = jnp.dtype(target.dtype).itemsize

    # Generation-aware VMEM budget (v5e/v6e: 128 MiB physical, v7x: 64 MiB).
    try:
        vmem_capacity = int(pltpu.get_tpu_info().vmem_capacity_bytes)
    except Exception:
        vmem_capacity = 64 * 1024 * 1024   # conservative fallback (v7x)
    vmem_budget = (vmem_capacity * 55) // 100

    # Per-pixel VMEM footprint: double-buffered logits + target blocks, plus a
    # conservative allowance for the (C, tile) f32 working arrays Mosaic may
    # materialize (x, e, p_v, onehot_v, products) and a few (1, tile) f32 rows.
    bytes_per_pixel = (2 * C * logits_isz      # 2x logits input block
                       + 2 * tgt_isz           # 2x target input block
                       + 6 * C * 4             # in-kernel f32 temps
                       + 16)                   # (1, tile) f32 rows
    max_tile_budget = _rdown(max(vmem_budget // bytes_per_pixel, 128), 128)

    # Lane-dense pixel tile: target ~8 MiB of logits per block (dtype-aware) so
    # per-grid-step overhead is amortized and DMA rows are long & contiguous.
    target_block_bytes = 8 * 1024 * 1024
    tile_from_target = _rdown(max(target_block_bytes // (C * logits_isz), 128), 128)

    tile = max(128, min(_rup(HW, 128), tile_from_target, max_tile_budget))
    if max_tile is not None:
        tile = max(128, min(tile, _rdown(max(int(max_tile), 128), 128)))
    hw_tiles = pl.cdiv(HW, tile)
    needs_hw_mask = (HW % tile) != 0

    # Explicit scoped-VMEM limit: the v5e default (16 MiB) is too small for the
    # tiles we pick; never exceed ~90% of physical so double-buffering fits.
    vmem_limit = min((vmem_capacity * 9) // 10, 128 * 1024 * 1024)

    kernel = functools.partial(
        _jaccard_kernel,
        ignore_index=int(ignore_index),
        hw=HW,
        tile_hw=tile,
        needs_hw_mask=needs_hw_mask,
    )

    inter_out, total_out = pl.pallas_call(
        kernel,
        out_shape=(
            jax.ShapeDtypeStruct((N, C, 1), jnp.float32),   # per-image intersection
            jax.ShapeDtypeStruct((N, C, 1), jnp.float32),   # per-image p+onehot sum
        ),
        grid_spec=pltpu.PrefetchScalarGridSpec(
            num_scalar_prefetch=0,
            grid=(N, hw_tiles),
            in_specs=[
                pl.BlockSpec((1, C, tile), lambda n, i: (n, 0, i)),
                pl.BlockSpec((1, 1, tile), lambda n, i: (n, 0, i)),
            ],
            out_specs=[
                pl.BlockSpec((1, C, 1), lambda n, i: (n, 0, 0)),
                pl.BlockSpec((1, C, 1), lambda n, i: (n, 0, 0)),
            ],
        ),
        # Batch axis is parallel (per-image partial outputs, so a v7x chip can
        # split it across its 2 TensorCores); the pixel axis accumulates into
        # the resident output block and stays sequential.
        compiler_params=pltpu.CompilerParams(
            dimension_semantics=("parallel", "arbitrary"),
            vmem_limit_bytes=int(vmem_limit)),
    )(x, t)

    # Tiny epilogue over N*C scalars in plain JAX (matches PyTorch: classes are
    # reduced over the whole flattened batch).
    inter = jnp.sum(inter_out[:, :, 0], axis=0)     # (C,)
    total = jnp.sum(total_out[:, :, 0], axis=0)     # (C,)
    union = total - inter
    iou = (inter + smooth) / (union + smooth)
    return jnp.mean(1.0 - iou)


def jaccard_loss_ref(logits, target, *, ignore_index=255, smooth=1.0):
    """Pure-JAX reference mirroring the PyTorch forward."""
    N, C, H, W = logits.shape
    x = jnp.transpose(logits, (0, 2, 3, 1)).reshape(-1, C).astype(jnp.float32)
    t = target.reshape(-1).astype(jnp.int32)
    p = jax.nn.softmax(x, axis=1)
    valid = (t != ignore_index).astype(jnp.float32)[:, None]
    onehot = (t[:, None] == jnp.arange(C)[None, :]).astype(jnp.float32)
    inter = jnp.sum(p * onehot * valid, axis=0)
    total = jnp.sum((p + onehot) * valid, axis=0)
    union = total - inter
    iou = (inter + smooth) / (union + smooth)
    return jnp.mean(1.0 - iou)


if __name__ == "__main__":
    key = jax.random.PRNGKey(0)
    k1, k2, k3 = jax.random.split(key, 3)

    N, C, H, W = 2, 4, 16, 16
    logits = jax.random.normal(k1, (N, C, H, W), dtype=jnp.float32)
    target = jax.random.randint(k2, (N, H, W), 0, C, dtype=jnp.int32)
    # Sprinkle ignored pixels, then ship targets as uint8 (255 fits) so the
    # kernel reads 1 byte per pixel instead of 4.
    ignore_mask = jax.random.bernoulli(k3, 0.1, (N, H, W))
    target = jnp.where(ignore_mask, 255, target).astype(jnp.uint8)

    loss = jaccard_loss(logits, target, ignore_index=255, smooth=1.0)
    loss = jax.block_until_ready(loss)

    ref = jaccard_loss_ref(logits, target, ignore_index=255, smooth=1.0)
    assert jnp.allclose(loss, ref, atol=1e-5, rtol=1e-5), (loss, ref)

    print("KERNEL_OK")
</pallas_src>

<mosaic_0001>
module attributes {stable_mosaic.version = 11 : i64} {
  func.func @_jaccard_kernel(%arg0: i32, %arg1: i32, %arg2: memref<1x4x256xf32, #tpu.memory_space<vmem>>, %arg3: memref<1x1x256xi8, #tpu.memory_space<vmem>>, %arg4: memref<1x4x1xf32, #tpu.memory_space<vmem>>, %arg5: memref<1x4x1xf32, #tpu.memory_space<vmem>>) attributes {dimension_semantics = [#tpu.dimension_semantics<parallel>, #tpu.dimension_semantics<arbitrary>], iteration_bounds = array<i64: 2, 1>, scalar_prefetch = 0 : i64, scratch_operands = 0 : i64, tpu.core_type = #tpu.core_type<tc>, window_params = [{transform_indices = @transform_0, window_bounds = array<i64: 1, 4, 256>}, {transform_indices = @transform_1, window_bounds = array<i64: 1, 1, 256>}, {transform_indices = @transform_2, window_bounds = array<i64: 1, 4, 1>}, {transform_indices = @transform_3, window_bounds = array<i64: 1, 4, 1>}]} {
    %c0_i32 = arith.constant 0 : i32
    %0 = arith.cmpi eq, %arg1, %c0_i32 : i32
    %1 = arith.extui %0 : i1 to i32
    %c0_i32_0 = arith.constant 0 : i32
    %2 = arith.cmpi ne, %1, %c0_i32_0 : i32
    scf.if %2 {
      %cst_22 = arith.constant 0.000000e+00 : f32
      %46 = vector.broadcast %cst_22 : f32 to vector<1x4x1xf32>
      %c0_23 = arith.constant 0 : index
      %c0_24 = arith.constant 0 : index
      %c0_25 = arith.constant 0 : index
      %47 = vector.load %arg4[%c0_23, %c0_24, %c0_25] : memref<1x4x1xf32, #tpu.memory_space<vmem>>, vector<1x4x1xf32>
      tpu.vector_store %arg4[%c0_23, %c0_24, %c0_25], %46 {strides = array<i32>} : memref<1x4x1xf32, #tpu.memory_space<vmem>>, vector<1x4x1xf32>,
      %cst_26 = arith.constant 0.000000e+00 : f32
      %48 = vector.broadcast %cst_26 : f32 to vector<1x4x1xf32>
      %c0_27 = arith.constant 0 : index
      %c0_28 = arith.constant 0 : index
      %c0_29 = arith.constant 0 : index
      %49 = vector.load %arg5[%c0_27, %c0_28, %c0_29] : memref<1x4x1xf32, #tpu.memory_space<vmem>>, vector<1x4x1xf32>
      tpu.vector_store %arg5[%c0_27, %c0_28, %c0_29], %48 {strides = array<i32>} : memref<1x4x1xf32, #tpu.memory_space<vmem>>, vector<1x4x1xf32>,
    } else {
    }
    %c0 = arith.constant 0 : index
    %c0_1 = arith.constant 0 : index
    %c0_2 = arith.constant 0 : index
    %3 = vector.load %arg2[%c0, %c0_1, %c0_2] : memref<1x4x256xf32, #tpu.memory_space<vmem>>, vector<1x4x256xf32>
    %4 = vector.shape_cast %3 : vector<1x4x256xf32> to vector<4x256xf32>
    %c0_3 = arith.constant 0 : index
    %c0_4 = arith.constant 0 : index
    %c0_5 = arith.constant 0 : index
    %5 = vector.load %arg3[%c0_3, %c0_4, %c0_5] : memref<1x1x256xi8, #tpu.memory_space<vmem>>, vector<1x1x256xi8>
    %6 = vector.shape_cast %5 : vector<1x1x256xi8> to vector<1x256xi8>
    %7 = arith.extui %6 : vector<1x256xi8> to vector<1x256xi32>
    %c255_i32 = arith.constant 255 : i32
    %8 = vector.broadcast %c255_i32 : i32 to vector<1x256xi32>
    %9 = arith.cmpi ne, %7, %8 : vector<1x256xi32>
    %cst = arith.constant dense<0xFF800000> : vector<256xf32>
    %10 = vector.multi_reduction <maximumf>, %4, %cst [0] : vector<4x256xf32> to vector<256xf32>
    %11 = vector.shape_cast %10 : vector<256xf32> to vector<1x256xf32>
    %12 = vector.broadcast %11 : vector<1x256xf32> to vector<4x256xf32>
    %13 = arith.subf %4, %12 : vector<4x256xf32>
    %14 = math.exp %13 : vector<4x256xf32>
    %cst_6 = arith.constant dense<0.000000e+00> : vector<256xf32>
    %15 = vector.multi_reduction <add>, %14, %cst_6 [0] : vector<4x256xf32> to vector<256xf32>
    %16 = vector.shape_cast %15 : vector<256xf32> to vector<1x256xf32>
    %17 = arith.extui %9 : vector<1x256xi1> to vector<1x256xi32>
    %18 = arith.sitofp %17 : vector<1x256xi32> to vector<1x256xf32>
    %19 = tpu.reciprocal %16 : vector<1x256xf32> -> vector<1x256xf32>
    %20 = arith.mulf %19, %18 : vector<1x256xf32>
    %c-1_i32 = arith.constant -1 : i32
    %21 = vector.broadcast %c-1_i32 : i32 to vector<1x256xi32>
    %22 = arith.select %9, %7, %21 : vector<1x256xi1>, vector<1x256xi32>
    %23 = vector.broadcast %20 : vector<1x256xf32> to vector<4x256xf32>
    %24 = arith.mulf %14, %23 : vector<4x256xf32>
    %25 = tpu.iota {dimensions = array<i32: 0>} : vector<4x256xi32>
    %26 = vector.broadcast %22 : vector<1x256xi32> to vector<4x256xi32>
    %27 = arith.cmpi eq, %26, %25 : vector<4x256xi32>
    %28 = arith.extui %27 : vector<4x256xi1> to vector<4x256xi32>
    %29 = arith.sitofp %28 : vector<4x256xi32> to vector<4x256xf32>
    %c0_7 = arith.constant 0 : index
    %c0_8 = arith.constant 0 : index
    %c0_9 = arith.constant 0 : index
    %30 = vector.load %arg4[%c0_7, %c0_8, %c0_9] : memref<1x4x1xf32, #tpu.memory_space<vmem>>, vector<1x4x1xf32>
    %31 = arith.mulf %24, %29 : vector<4x256xf32>
    %cst_10 = arith.constant dense<0.000000e+00> : vector<4xf32>
    %32 = vector.multi_reduction <add>, %31, %cst_10 [1] : vector<4x256xf32> to vector<4xf32>
    %33 = vector.shape_cast %32 : vector<4xf32> to vector<4x1xf32>
    %34 = vector.shape_cast %33 : vector<4x1xf32> to vector<1x4x1xf32>
    %35 = arith.addf %30, %34 : vector<1x4x1xf32>
    %c0_11 = arith.constant 0 : index
    %c0_12 = arith.constant 0 : index
    %c0_13 = arith.constant 0 : index
    %36 = vector.load %arg4[%c0_11, %c0_12, %c0_13] : memref<1x4x1xf32, #tpu.memory_space<vmem>>, vector<1x4x1xf32>
    tpu.vector_store %arg4[%c0_11, %c0_12, %c0_13], %35 {strides = array<i32>} : memref<1x4x1xf32, #tpu.memory_space<vmem>>, vector<1x4x1xf32>,
    %c0_14 = arith.constant 0 : index
    %c0_15 = arith.constant 0 : index
    %c0_16 = arith.constant 0 : index
    %37 = vector.load %arg5[%c0_14, %c0_15, %c0_16] : memref<1x4x1xf32, #tpu.memory_space<vmem>>, vector<1x4x1xf32>
    %cst_17 = arith.constant dense<0.000000e+00> : vector<4xf32>
    %38 = vector.multi_reduction <add>, %24, %cst_17 [1] : vector<4x256xf32> to vector<4xf32>
    %39 = vector.shape_cast %38 : vector<4xf32> to vector<4x1xf32>
    %cst_18 = arith.constant dense<0.000000e+00> : vector<4xf32>
    %40 = vector.multi_reduction <add>, %29, %cst_18 [1] : vector<4x256xf32> to vector<4xf32>
    %41 = vector.shape_cast %40 : vector<4xf32> to vector<4x1xf32>
    %42 = arith.addf %39, %41 : vector<4x1xf32>
    %43 = vector.shape_cast %42 : vector<4x1xf32> to vector<1x4x1xf32>
    %44 = arith.addf %37, %43 : vector<1x4x1xf32>
    %c0_19 = arith.constant 0 : index
    %c0_20 = arith.constant 0 : index
    %c0_21 = arith.constant 0 : index
    %45 = vector.load %arg5[%c0_19, %c0_20, %c0_21] : memref<1x4x1xf32, #tpu.memory_space<vmem>>, vector<1x4x1xf32>
    tpu.vector_store %arg5[%c0_19, %c0_20, %c0_21], %44 {strides = array<i32>} : memref<1x4x1xf32, #tpu.memory_space<vmem>>, vector<1x4x1xf32>,
    return
  }
  func.func @transform_0(%arg0: i32, %arg1: i32) -> (i32, i32, i32) {
    %c0_i32 = arith.constant 0 : i32
    %c0_i32_0 = arith.constant 0 : i32
    return %arg0, %c0_i32, %arg1 : i32, i32, i32
  }
  func.func @transform_1(%arg0: i32, %arg1: i32) -> (i32, i32, i32) {
    %c0_i32 = arith.constant 0 : i32
    %c0_i32_0 = arith.constant 0 : i32
    return %arg0, %c0_i32, %arg1 : i32, i32, i32
  }
  func.func @transform_2(%arg0: i32, %arg1: i32) -> (i32, i32, i32) {
    %c0_i32 = arith.constant 0 : i32
    %c0_i32_0 = arith.constant 0 : i32
    %c0_i32_1 = arith.constant 0 : i32
    return %arg0, %c0_i32, %c0_i32_0 : i32, i32, i32
  }
  func.func @transform_3(%arg0: i32, %arg1: i32) -> (i32, i32, i32) {
    %c0_i32 = arith.constant 0 : i32
    %c0_i32_0 = arith.constant 0 : i32
    %c0_i32_1 = arith.constant 0 : i32
    return %arg0, %c0_i32, %c0_i32_0 : i32, i32, i32
  }
}

</mosaic_0001>

<llo_original>
// kernel: tpu_custom_call.1
$region0: #{tpu_custom_call.1}
  #allocation0 [shape = 'u32[]', space=smem, size = 0x4, offset = 0x4, fixed_abs, tag = 'smem constant byte address 0x4 - core index']
  #allocation1 [shape = 'u32[144,128]{1,0:T(1,128)}', space=vmem, size = 0x12000, scoped, tag = 'internal scratch']
  %s0 = inlined_call_operand.hbm [shape: f32[2,4,256], index: 0, kind: input, shape index: {}]
  %s1 = inlined_call_operand.vmem [shape: u8[2,1,256], index: 1, kind: input, shape index: {}]
  %s2 = inlined_call_operand.vmem [shape: f32[2,4,1], index: 2, kind: output, shape index: {0}]
  %s3 = inlined_call_operand.vmem [shape: f32[2,4,1], index: 3, kind: output, shape index: {1}]
  %4 = xla_tuple %s2, %s3
  %s5 = sld [smem:[#allocation0]]
  $region57: #{tpu_custom_call.1} parent=0
    _
  %s7 = ssub.s32 1, %s5
  %s8 = scalar_select 0, %s7, %s5
  $region1: #{tpu_custom_call.1} parent=0
    #allocation2 [shape = 'u8[8192]{0}', space=vmem, size = 0x2000, scoped, tag = 'input window, operand 0']
    #allocation3 [shape = 's32[2]{0}', space=sflag, size = 0x8, scoped, tag = 'scoped memory for tpu_custom_call.1']
    %9 = vsyncpa [#allocation3], 0
    %s10 = scalar_lea.sflag [#allocation3], 1
    %11 = vsyncpa %s10, 0
    loop: start=0, step=1, limit=4
    $region2: #{tpu_custom_call.1} parent=1 // loop_pre_header
      _
    $region3: #{tpu_custom_call.1} parent=1 // loop_header
      %s13 = sphi 0, %s17
      %p14 = scmp.ge.s32.totalorder %s13, 4
      %s20 = sphi 0, %s32
      %s21 = sphi 0, %s28
      %s22 = sphi 0, %s20
      %s23 = sphi 0, %s21
      %s24 = sphi 0, %s22
      %s25 = sphi 0, %s23
      %s37 = sphi 0, %s39
      %s40 = sphi 0, %s37
      %s41 = sphi 0, %s40
      %s57 = sphi 0, %s41
      %s65 = sphi 0, %s67
      %s68 = sphi 0, %s65
      %s69 = sphi 0, %s68
      %s85 = sphi 0, %s69
      %s91 = sphi 0, %s93
      %s94 = sphi 0, %s91
      %s95 = sphi 0, %s94
      %s111 = sphi 0, %s95
      %s117 = sphi 0, %s119
      %s120 = sphi 0, %s117
      %s121 = sphi 0, %s120
      %s137 = sphi 0, %s121
    $region4: #{tpu_custom_call.1} parent=1 // loop_header_branch
      %16 = sbr.rel (%p14) target = $region8
    $region5: #{tpu_custom_call.1} parent=1 // loop_body
      %s18 = ssub.s32 %s13, 1
      %s19 = ssub.s32 %s13, 2
      %s26 = sadd.s32 1, %s21
      %p27 = scmp.ge.s32.totalorder %s26, 1
      %s28 = scalar_select %p27, 0, %s26
      %s29 = sadd.s32 1, %s20
      %s30 = scalar_select %p27, %s29, %s20
      %p31 = scmp.ge.s32.totalorder %s30, 2
      %s32 = scalar_select %p31, 0, %s30
      %s33 = ssub.s32 %s20, %s32
      %s34 = ssub.s32 %s21, %s28
      %s35 = sor.u32 %s33, %s34
      %p36 = scmp.eq.s32.totalorder %s35, 0
      %s38 = sadd.s32 %s37, 1
      %s39 = scalar_select %p36, %s37, %s38
      %p42 = pneg %p36
      %p43 = scmp.eq.s32.totalorder %s13, 1
      %p44 = por %p42, %p43
      %p45 = scmp.ne.s32.totalorder %s37, %s40
      %p46 = scmp.eq.s32.totalorder %s13, 0
      %p47 = por %p45, %p46
      %p48 = scmp.ne.s32.totalorder %s37, %s40
      %p49 = scmp.eq.s32.totalorder %s18, 1
      %p50 = por %p48, %p49
      %p51 = scmp.ne.s32.totalorder %s40, %s41
      %p52 = scmp.eq.s32.totalorder %s18, 0
      %p53 = por %p51, %p52
      %p54 = scmp.ne.s32.totalorder %s40, %s41
      %p55 = scmp.eq.s32.totalorder %s19, 1
      %p56 = por %p54, %p55
      %p58 = scmp.ne.s32.totalorder %s41, %s57
      %p59 = scmp.eq.s32.totalorder %s19, 0
      %p60 = por %p58, %p59
      %s61 = ssub.s32 %s20, %s32
      %s62 = ssub.s32 %s21, %s28
      %s63 = sor.u32 %s61, %s62
      %p64 = scmp.eq.s32.totalorder %s63, 0
      %s66 = sadd.s32 %s65, 1
      %s67 = scalar_select %p64, %s65, %s66
      %p70 = pneg %p64
      %p71 = scmp.eq.s32.totalorder %s13, 1
      %p72 = por %p70, %p71
      %p73 = scmp.ne.s32.totalorder %s65, %s68
      %p74 = scmp.eq.s32.totalorder %s13, 0
      %p75 = por %p73, %p74
      %p76 = scmp.ne.s32.totalorder %s65, %s68
      %p77 = scmp.eq.s32.totalorder %s18, 1
      %p78 = por %p76, %p77
      %p79 = scmp.ne.s32.totalorder %s68, %s69
      %p80 = scmp.eq.s32.totalorder %s18, 0
      %p81 = por %p79, %p80
      %p82 = scmp.ne.s32.totalorder %s68, %s69
      %p83 = scmp.eq.s32.totalorder %s19, 1
      %p84 = por %p82, %p83
      %p86 = scmp.ne.s32.totalorder %s69, %s85
      %p87 = scmp.eq.s32.totalorder %s19, 0
      %p88 = por %p86, %p87
      %s89 = ssub.s32 %s20, %s32
      %p90 = scmp.eq.s32.totalorder %s89, 0
      %s92 = sadd.s32 %s91, 1
      %s93 = scalar_select %p90, %s91, %s92
      %p96 = pneg %p90
      %p97 = scmp.eq.s32.totalorder %s13, 1
      %p98 = por %p96, %p97
      %p99 = scmp.ne.s32.totalorder %s91, %s94
      %p100 = scmp.eq.s32.totalorder %s13, 0
      %p101 = por %p99, %p100
      %p102 = scmp.ne.s32.totalorder %s91, %s94
      %p103 = scmp.eq.s32.totalorder %s18, 1
      %p104 = por %p102, %p103
      %p105 = scmp.ne.s32.totalorder %s94, %s95
      %p106 = scmp.eq.s32.totalorder %s18, 0
      %p107 = por %p105, %p106
      %p108 = scmp.ne.s32.totalorder %s94, %s95
      %p109 = scmp.eq.s32.totalorder %s19, 1
      %p110 = por %p108, %p109
      %p112 = scmp.ne.s32.totalorder %s95, %s111
      %p113 = scmp.eq.s32.totalorder %s19, 0
      %p114 = por %p112, %p113
      %s115 = ssub.s32 %s20, %s32
      %p116 = scmp.eq.s32.totalorder %s115, 0
      %s118 = sadd.s32 %s117, 1
      %s119 = scalar_select %p116, %s117, %s118
      %p122 = pneg %p116
      %p123 = scmp.eq.s32.totalorder %s13, 1
      %p124 = por %p122, %p123
      %p125 = scmp.ne.s32.totalorder %s117, %s120
      %p126 = scmp.eq.s32.totalorder %s13, 0
      %p127 = por %p125, %p126
      %p128 = scmp.ne.s32.totalorder %s117, %s120
      %p129 = scmp.eq.s32.totalorder %s18, 1
      %p130 = por %p128, %p129
      %p131 = scmp.ne.s32.totalorder %s120, %s121
      %p132 = scmp.eq.s32.totalorder %s18, 0
      %p133 = por %p131, %p132
      %p134 = scmp.ne.s32.totalorder %s120, %s121
      %p135 = scmp.eq.s32.totalorder %s19, 1
      %p136 = por %p134, %p135
      %p138 = scmp.ne.s32.totalorder %s121, %s137
      %p139 = scmp.eq.s32.totalorder %s19, 0
      %p140 = por %p138, %p139
      %p141 = scmp.le.s32.totalorder 1, %s13
      %p142 = scmp.lt.s32.totalorder %s13, 3
      %p143 = pnand %p141, %p142
      %p144 = pneg %p143
      // Predicated region
      $region9: #{tpu_custom_call.1} parent=5 // pred_check
        _
      $region10: #{tpu_custom_call.1} parent=5 // pred_check_branch
        %146 = sbr.rel (%p143) target = $region12
      $region11: #{tpu_custom_call.1} parent=5 // pred_region
        %s147 = ssub.s32 %s13, 1
      $region12: #{tpu_custom_call.1} parent=5 // pred_fallthru
        _
      %p148 = scmp.lt.s32.totalorder %s13, 2
      // Predicated region
      $region13: #{tpu_custom_call.1} parent=5 // pred_check
        %p149 = pneg %p148
      $region14: #{tpu_custom_call.1} parent=5 // pred_check_branch
        %151 = sbr.rel (%p149) target = $region16
      $region15: #{tpu_custom_call.1} parent=5 // pred_region
        // Predicated region
        $region17: #{tpu_custom_call.1} parent=15 // pred_check
          %p152 = pneg %p47
        $region18: #{tpu_custom_call.1} parent=15 // pred_check_branch
          %154 = sbr.rel (%p152) target = $region20
        $region19: #{tpu_custom_call.1} parent=15 // pred_region
          %s155 = sand.u32 %s37, 1
          %s156 = scalar_lea.sflag [#allocation3], %s155
          %s157 = sand.u32 %s37, 1
          %s158 = smul.addr %s157, 8
          %s159 = scalar_lea.vmem [#allocation2], %s158
          %s160 = smul.u32 2, %s21
          %s162 = ssub.s32 128, 128
          %163 = vsyncadd %s156, %s162
          %s164 = smul.addr %s20, 2
          %s165 = sadd.s32 %s160, %s164
          %s166 = smul.addr %s165, 64
          %s167 = scalar_lea.hbm %s0, %s166
          %s169 = sshll.u32 %s159, 4
          %s170 = int_to_ptr.vmem [resolvable:$true] %s169
          %172 = dma.hbm_to_vmem [thread:$0]  %s167, 128, %s170, %s156
        $region20: #{tpu_custom_call.1} parent=15 // pred_fallthru
          _
        // Predicated region
        $region21: #{tpu_custom_call.1} parent=15 // pred_check
          %p173 = pneg %p75
        $region22: #{tpu_custom_call.1} parent=15 // pred_check_branch
          %175 = sbr.rel (%p173) target = $region24
        $region23: #{tpu_custom_call.1} parent=15 // pred_region
          %s176 = smul.u32 2, %s21
          %p177 = scmp.lt.s32.totalorder %s20, 1
          %s178 = scalar_select %p177, %s20, 1
          %p179 = scmp.lt.s32.totalorder %s176, 1
          %s180 = scalar_select %p179, %s176, 1
          %s181 = smul.addr %s178, 2
          %s182 = sadd.s32 %s180, %s181
          %s183 = scalar_lea.vmem %s1, %s182
          %s184 = smul.u32 2, %s21
        $region24: #{tpu_custom_call.1} parent=15 // pred_fallthru
          _
      $region16: #{tpu_custom_call.1} parent=5 // pred_fallthru
        _
      %p185 = scmp.le.s32.totalorder 1, %s13
      %p186 = scmp.lt.s32.totalorder %s13, 3
      %p187 = pnand %p185, %p186
      %p188 = pneg %p187
      // Predicated region
      $region25: #{tpu_custom_call.1} parent=5 // pred_check
        _
      $region26: #{tpu_custom_call.1} parent=5 // pred_check_branch
        %190 = sbr.rel (%p187) target = $region28
      $region27: #{tpu_custom_call.1} parent=5 // pred_region
        %s191 = ssub.s32 %s13, 1
        %s192 = sand.u32 %s40, 1
        %s193 = scalar_lea.sflag [#allocation3], %s192
        %s194 = sand.u32 %s40, 1
        %s195 = smul.addr %s194, 8
        %s196 = scalar_lea.vmem [#allocation2], %s195
        // Predicated region
        $region29: #{tpu_custom_call.1} parent=27 // pred_check
          %p197 = pneg %p53
        $region30: #{tpu_custom_call.1} parent=27 // pred_check_branch
          %199 = sbr.rel (%p197) target = $region32
        $region31: #{tpu_custom_call.1} parent=27 // pred_region
          %200 = dma.done %s193, 128
        $region32: #{tpu_custom_call.1} parent=27 // pred_fallthru
          _
        %s201 = sand.u32 %s40, 1
        %s202 = scalar_lea.sflag [#allocation3], %s201
        %s203 = sand.u32 %s40, 1
        %s204 = smul.addr %s203, 8
        %s205 = scalar_lea.vmem [#allocation2], %s204
        %p206 = pneg %p53
        %p207 = pneg %p50
        %s208 = smul.u32 2, %s23
        %p209 = scmp.lt.s32.totalorder %s22, 1
        %s210 = scalar_select %p209, %s22, 1
        %p211 = scmp.lt.s32.totalorder %s208, 1
        %s212 = scalar_select %p211, %s208, 1
        %s213 = smul.addr %s210, 2
        %s214 = sadd.s32 %s212, %s213
        %s215 = scalar_lea.vmem %s1, %s214
        %p216 = pneg %p81
        %p217 = pneg %p78
        %p218 = pneg %p107
        %p219 = pneg %p104
        %p220 = scmp.lt.s32.totalorder %s22, 1
        %s221 = scalar_select %p220, %s22, 1
        %s222 = smul.addr %s221, 4
        %s223 = scalar_lea.vmem %s2, %s222
        %p224 = pneg %p133
        %p225 = pneg %p130
        %p226 = scmp.lt.s32.totalorder %s22, 1
        %s227 = scalar_select %p226, %s22, 1
        %s228 = smul.addr %s227, 4
        %s229 = scalar_lea.vmem %s3, %s228
        %s230 = smul.u32 2, %s23
        %s231 = smul.u32 2, %s23
        %p232 = scmp.lt.s32.totalorder %s22, 1
        %s233 = scalar_select %p232, %s22, 1
        %p234 = scmp.lt.s32.totalorder %s231, 1
        %s235 = scalar_select %p234, %s231, 1
        %s236 = smul.addr %s233, 2
        %s237 = sadd.s32 %s235, %s236
        %s238 = scalar_lea.vmem %s1, %s237
        %s239 = smul.u32 2, %s23
        %p240 = scmp.lt.s32.totalorder %s22, 1
        %s241 = scalar_select %p240, %s22, 1
        %s242 = smul.addr %s241, 4
        %s243 = scalar_lea.vmem %s2, %s242
        %p244 = scmp.lt.s32.totalorder %s22, 1
        %s245 = scalar_select %p244, %s22, 1
        %s246 = smul.addr %s245, 4
        %s247 = scalar_lea.vmem %s3, %s246
        %p248 = scmp.eq.s32.totalorder %s23, 0
        // Predicated region
        $region33: #{tpu_custom_call.1} parent=27 // pred_check
          %p249 = pneg %p248
        $region34: #{tpu_custom_call.1} parent=27 // pred_check_branch
          %251 = sbr.rel (%p249) target = $region36
        $region35: #{tpu_custom_call.1} parent=27 // pred_region
          %vm252 = vcmask 3072
          %253 = vst.msk [vmem:[%s243] sm:$0xf] %vm252, 0.0
          %254 = vst.msk [vmem:[%s247] sm:$0xf] %vm252, 0.0
        $region36: #{tpu_custom_call.1} parent=27 // pred_fallthru
          _
        %v255 = vld [vmem:[%s196] sm:$0xff]
        %v256 = vld [vmem:[%s238] sm:$0x3]
        %v257 = vunpack.c.0.s8 %v256
        %v258 = vand.u32 %v257, 255
        %vm259 = vcmp.ne.s32.totalorder %v258, 255
        %v261 = vcombine.high %v255, %v255
        %vm263 = vcmask 1043456
        %v264 = vsel %vm263, %v255, -inf
        %v265 = vrot.slane %v264, 4
        %v266 = vmax.f32 %v264, %v265
        %v267 = vrot.slane %v266, 2
        %v268 = vmax.f32 %v266, %v267
        %v269 = vrot.slane %v268, 1
        %v270 = vmax.f32 %v268, %v269
        %v271 = vsel %vm263, %v261, -inf
        %v272 = vrot.slane %v271, 4
        %v273 = vmax.f32 %v271, %v272
        %v274 = vrot.slane %v273, 2
        %v275 = vmax.f32 %v273, %v274
        %v276 = vrot.slane %v275, 1
        %v277 = vmax.f32 %v275, %v276
        %v280 = vcombine.low %v270, %v277
        %v282 = vsub.f32 %v255, %v280
        %v283 = vmul.f32 %v282, 1.442695
        %v284 = vpow.pop %v283
        %v286 = vcombine.high %v284, %v284
        %v288 = vsel %vm263, %v284, 0.0
        %v289 = vrot.slane %v288, 4
        %v290 = vadd.f32 %v288, %v289
        %v291 = vrot.slane %v290, 2
        %v292 = vadd.f32 %v290, %v291
        %v293 = vrot.slane %v292, 1
        %v294 = vadd.f32 %v292, %v293
        %v295 = vsel %vm263, %v286, 0.0
        %v296 = vrot.slane %v295, 4
        %v297 = vadd.f32 %v295, %v296
        %v298 = vrot.slane %v297, 2
        %v299 = vadd.f32 %v297, %v298
        %v300 = vrot.slane %v299, 1
        %v301 = vadd.f32 %v299, %v300
        %v302 = vsel %vm259, 1, 0
        %v303 = vcvt.s32.f32 %v302
        %v304 = vrcp.pop %v294
        %v305 = vrcp.pop %v301
        %v307 = vlaneseq
        %v308 = vshrl.u32 %v307, 7
        %v309 = vsub.s32 0, %v308
        %v310 = vrot.slane %v303, %v309
        %v311 = vlaneseq
        %v312 = vshrl.u32 %v311, 7
        %v313 = vsub.s32 4, %v312
        %v314 = vrot.slane %v303, %v313
        %v317 = vmul.f32 %v304, %v310
        %v318 = vmul.f32 %v305, %v314
        %v319 = vsel %vm259, %v258, 4294967295
        %v320 = vlaneseq
        %v321 = vshrl.u32 %v320, 7
        %v322 = vsub.s32 0, %v321
        %v323 = vrot.slane %v317, %v322
        %v324 = vlaneseq
        %v325 = vshrl.u32 %v324, 7
        %v326 = vsub.s32 0, %v325
        %v327 = vrot.slane %v318, %v326
        %v330 = vcombine.low %v323, %v327
        %v332 = vmul.f32 %v284, %v330
        %v333 = vlaneseq
        %v334 = vshrl.u32 %v333, 7
        %v335 = vlaneseq
        %v336 = vshrl.u32 %v335, 7
        %v337 = vsub.s32 0, %v336
        %v338 = vrot.slane %v319, %v337
        %v339 = vlaneseq
        %v340 = vshrl.u32 %v339, 7
        %v341 = vsub.s32 4, %v340
        %v342 = vrot.slane %v319, %v341
        %v343 = vlaneseq
        %v344 = vshrl.u32 %v343, 7
        %v345 = vsub.s32 0, %v344
        %v346 = vrot.slane %v338, %v345
        %v347 = vlaneseq
        %v348 = vshrl.u32 %v347, 7
        %v349 = vsub.s32 0, %v348
        %v350 = vrot.slane %v342, %v349
        %vm351 = vcmp.eq.s32.totalorder %v346, %v334
        %vm352 = vcmp.eq.s32.totalorder %v350, %v334
        %v353 = vsel %vm351, 1, 0
        %v354 = vsel %vm352, 1, 0
        %v355 = vcvt.s32.f32 %v353
        %v356 = vcvt.s32.f32 %v354
        %v357 = vld [vmem:[%s243] sm:$0xf]
        %v360 = vcombine.low %v355, %v356
        %v362 = vmul.f32 %v332, %v360
        %v364 = vcombine.high %v362, %v362
        %v366 = vsel %vm263, %v362, 0.0
        %v367 = vsel %vm263, %v364, 0.0
        %v368 = vadd.f32 %v366, %v367
        %369 = vadd.xlane.f32.xlu0 %v368
        %v370 = vpop.xlane.xlu0 %369
        %v371 = vadd.f32 %v357, %v370
        %vm372 = vcmask 3072
        %373 = vst.msk [vmem:[%s243] sm:$0xf] %vm372, %v371
        %v374 = vld [vmem:[%s247] sm:$0xf]
        %v376 = vcombine.high %v332, %v332
        %v378 = vsel %vm263, %v332, 0.0
        %v379 = vsel %vm263, %v376, 0.0
        %v380 = vadd.f32 %v378, %v379
        %381 = vadd.xlane.f32.xlu0 %v380
        %v382 = vpop.xlane.xlu0 %381
        %v383 = vsel %vm263, %v355, 0.0
        %v384 = vsel %vm263, %v356, 0.0
        %v385 = vadd.f32 %v383, %v384
        %386 = vadd.xlane.f32.xlu0 %v385
        %v387 = vpop.xlane.xlu0 %386
        %v388 = vadd.f32 %v382, %v387
        %v389 = vadd.f32 %v374, %v388
        %390 = vst.msk [vmem:[%s247] sm:$0xf] %vm372, %v389
        %p391 = scmp.lt.s32.totalorder %s22, 1
        %s392 = scalar_select %p391, %s22, 1
        %s393 = smul.addr %s392, 4
        %s394 = scalar_lea.vmem %s2, %s393
        %p395 = scmp.lt.s32.totalorder %s22, 1
        %s396 = scalar_select %p395, %s22, 1
        %s397 = smul.addr %s396, 4
        %s398 = scalar_lea.vmem %s3, %s397
        // Predicated region
        $region37: #{tpu_custom_call.1} parent=27 // pred_check
          %p399 = pneg %p104
        $region38: #{tpu_custom_call.1} parent=27 // pred_check_branch
          %401 = sbr.rel (%p399) target = $region40
        $region39: #{tpu_custom_call.1} parent=27 // pred_region
          _
        $region40: #{tpu_custom_call.1} parent=27 // pred_fallthru
          _
        // Predicated region
        $region41: #{tpu_custom_call.1} parent=27 // pred_check
          %p402 = pneg %p130
        $region42: #{tpu_custom_call.1} parent=27 // pred_check_branch
          %404 = sbr.rel (%p402) target = $region44
        $region43: #{tpu_custom_call.1} parent=27 // pred_region
          _
        $region44: #{tpu_custom_call.1} parent=27 // pred_fallthru
          _
      $region28: #{tpu_custom_call.1} parent=5 // pred_fallthru
        _
      %p405 = scmp.le.s32.totalorder 2, %s13
      // Predicated region
      $region45: #{tpu_custom_call.1} parent=5 // pred_check
        %p406 = pneg %p405
      $region46: #{tpu_custom_call.1} parent=5 // pred_check_branch
        %408 = sbr.rel (%p406) target = $region48
      $region47: #{tpu_custom_call.1} parent=5 // pred_region
        %s409 = ssub.s32 %s13, 2
        // Predicated region
        $region49: #{tpu_custom_call.1} parent=47 // pred_check
          %p410 = pneg %p110
        $region50: #{tpu_custom_call.1} parent=47 // pred_check_branch
          %412 = sbr.rel (%p410) target = $region52
        $region51: #{tpu_custom_call.1} parent=47 // pred_region
          %p413 = scmp.lt.s32.totalorder %s24, 1
          %s414 = scalar_select %p413, %s24, 1
          %s415 = smul.addr %s414, 4
          %s416 = scalar_lea.vmem %s2, %s415
        $region52: #{tpu_custom_call.1} parent=47 // pred_fallthru
          _
        // Predicated region
        $region53: #{tpu_custom_call.1} parent=47 // pred_check
          %p417 = pneg %p136
        $region54: #{tpu_custom_call.1} parent=47 // pred_check_branch
          %419 = sbr.rel (%p417) target = $region56
        $region55: #{tpu_custom_call.1} parent=47 // pred_region
          %p420 = scmp.lt.s32.totalorder %s24, 1
          %s421 = scalar_select %p420, %s24, 1
          %s422 = smul.addr %s421, 4
          %s423 = scalar_lea.vmem %s3, %s422
        $region56: #{tpu_custom_call.1} parent=47 // pred_fallthru
          _
      $region48: #{tpu_custom_call.1} parent=5 // pred_fallthru
        _
    $region6: #{tpu_custom_call.1} parent=1 // loop_footer
      %s17 = sadd.s32 1, %s13
    $region7: #{tpu_custom_call.1} parent=1 // loop_footer_branch
      %12 = sbr.rel target = $region3
    $region8: #{tpu_custom_call.1} parent=1 // loop_exit
      _
    %424 = vsyncpa [#allocation3], 1
    %s425 = scalar_lea.sflag [#allocation3], 1
    %426 = vsyncpa %s425, 1

</llo_original>
